<compile_context>
chip_gen: v7x
topology: tpu7x:2x2x1
jax: 0.10.0
libtpu: 0.0.40
codegen_flags: <defaults>
</compile_context>

<pallas_src>
import numpy as np

import jax
import jax.numpy as jnp
from jax import lax
from jax.experimental import pallas as pl
from jax.experimental.pallas import tpu as pltpu

# ----------------------------- configuration --------------------------------
HIDDEN = 32
NUM_EXPERTS = 8
TOP_K = 2
CAPACITY_FACTOR = 1.5
TEMPERATURE = 1.0
BALANCE_COEFFICIENT = 0.01
Z_LOSS_COEFFICIENT = 0.001

MATMUL_DTYPE = jnp.float32   # bf16 on v6e/v7x if MXU/DMA ever matters (H=32, E=8)
TN_CAP = 2048                # token-tile width (multiple of 128)


# ------------------------------ shared math ----------------------------------
def _true_recip(x):
    return 1.0 / x


def _fast_recip(x):
    # EUP reciprocal seed + one Newton-Raphson step (~f32 accuracy, no VPU divide).
    # Only valid inside a Pallas kernel.
    r = pl.reciprocal(x, approx=True)
    return r * (2.0 - x * r)


def _erf(x, recip):
    # Abramowitz & Stegun 7.1.26 polynomial (|err| <= 1.5e-7); uses only
    # exp / mul / add / where (+ the supplied reciprocal), lowers cleanly.
    a1, a2, a3, a4, a5 = (0.254829592, -0.284496736, 1.421413741,
                          -1.453152027, 1.061405429)
    p = 0.3275911
    ax = jnp.abs(x)
    t = recip(1.0 + p * ax)
    poly = t * (a1 + t * (a2 + t * (a3 + t * (a4 + t * a5))))
    y = 1.0 - poly * jnp.exp(-ax * ax)
    return jnp.where(x >= 0.0, y, -y)


def _gelu(x, recip):
    # exact (erf-based) GELU, matching torch.nn.GELU() default
    return 0.5 * x * (1.0 + _erf(x * 0.7071067811865476, recip))


# ------------------------------- kernel -------------------------------------
def _eplb_router_kernel(x_ref, w1_ref, b1_ref, w2_ref, b2_ref, w3_ref, b3_ref,
                        probs_ref, meta_ref, lse_ref):
    tn = x_ref.shape[0]
    cd = MATMUL_DTYPE
    x = x_ref[...].astype(cd)                                        # [TN, H]

    # router MLP: Linear(H,2H) -> GELU -> Linear(2H,H) -> GELU -> Linear(H,E)
    # First matmul contracts the minor dims of both operands (A @ B^T pattern),
    # producing tokens-on-lanes [2H, TN] without any explicit transpose op.
    h1 = _gelu(lax.dot_general(w1_ref[...].astype(cd), x,
                               (((1,), (1,)), ((), ())),
                               preferred_element_type=jnp.float32)
               + b1_ref[...], _fast_recip)                           # [2H, TN]
    h2 = _gelu(jnp.dot(w2_ref[...].astype(cd), h1.astype(cd),
                       preferred_element_type=jnp.float32)
               + b2_ref[...], _fast_recip)                           # [H, TN]
    # w3/b3 already carry temperature, expert_weights and the expert-mask bias.
    logits = (jnp.dot(w3_ref[...].astype(cd), h2.astype(cd),
                      preferred_element_type=jnp.float32)
              + b3_ref[...])                                         # [E, TN]

    # softmax over the expert (sublane) axis + logsumexp for the z-loss
    m = jnp.max(logits, axis=0, keepdims=True)                       # [1, TN]
    e = jnp.exp(logits - m)
    s = jnp.sum(e, axis=0, keepdims=True)
    probs = e * _fast_recip(s)                                       # [E, TN]
    lse = m + jnp.log(s)                                             # [1, TN]

    # top-k via iterative max (first-index tie-break, same as torch.topk)
    iota_f = lax.broadcasted_iota(jnp.int32, (NUM_EXPERTS, tn), 0).astype(jnp.float32)
    remaining = probs
    idx_rows, val_rows = [], []
    for _ in range(TOP_K):
        mval = jnp.max(remaining, axis=0, keepdims=True)             # [1, TN]
        cand = jnp.where(remaining == mval, iota_f, float(NUM_EXPERTS))
        midx = jnp.min(cand, axis=0, keepdims=True)                  # [1, TN]
        oh = iota_f == midx                                          # [E, TN] bool
        idx_rows.append(midx)
        val_rows.append(mval)
        remaining = jnp.where(oh, -1.0, remaining)

    denom = val_rows[0]
    for v in val_rows[1:]:
        denom = denom + v
    inv_den = _fast_recip(denom)

    # lane-dense stores (tokens on lanes): 8 prob rows + 2K meta rows + 1 lse row
    probs_ref[...] = probs
    for i in range(TOP_K):
        meta_ref[i:i + 1, :] = idx_rows[i]                           # expert index
        meta_ref[TOP_K + i:TOP_K + i + 1, :] = val_rows[i] * inv_den  # norm. gate
    lse_ref[...] = lse


# ------------------------------- wrapper -------------------------------------
def _round_up(x, m):
    return (x + m - 1) // m * m


@jax.jit
def _forward_impl(hidden_states, params, expert_mask, expert_weights):
    B, S, H = hidden_states.shape
    assert H == HIDDEN
    N = B * S
    E = NUM_EXPERTS

    # natural [N, H] token layout (no XLA transpose pass)
    x = hidden_states.reshape(N, H).astype(jnp.float32)

    n128 = _round_up(N, 128)
    TN = min(TN_CAP, n128)
    if n128 // TN < 2 and n128 >= 256:
        # keep >=2 grid steps so v7x can use both TensorCores
        TN = _round_up((n128 + 1) // 2, 128)
    N_pad = _round_up(N, TN)
    if N_pad != N:
        x = jnp.pad(x, ((0, N_pad - N), (0, 0)))
    grid = (N_pad // TN,)

    # fold temperature / expert_weights / mask bias into the last linear layer
    scale = (expert_weights.astype(jnp.float32) / TEMPERATURE).reshape(E, 1)
    mask_bias = ((1.0 - expert_mask.astype(jnp.float32)) * -1e9).reshape(E, 1)
    w3 = params["w3"].astype(jnp.float32) * scale
    b3 = params["b3"].astype(jnp.float32).reshape(E, 1) * scale + mask_bias

    col = lambda v: v.astype(jnp.float32).reshape(-1, 1)
    full2d = lambda shape: pl.BlockSpec(shape, lambda t: (0, 0))

    grid_spec = pltpu.PrefetchScalarGridSpec(
        num_scalar_prefetch=0,
        grid=grid,
        in_specs=[
            pl.BlockSpec((TN, HIDDEN), lambda t: (t, 0)),            # x tile
            full2d((2 * HIDDEN, HIDDEN)),                            # w1
            full2d((2 * HIDDEN, 1)),                                 # b1
            full2d((HIDDEN, 2 * HIDDEN)),                            # w2
            full2d((HIDDEN, 1)),                                     # b2
            full2d((E, HIDDEN)),                                     # w3 (pre-scaled)
            full2d((E, 1)),                                          # b3 (+mask bias)
        ],
        out_specs=[
            pl.BlockSpec((E, TN), lambda t: (0, t)),                 # probs^T
            pl.BlockSpec((2 * TOP_K, TN), lambda t: (0, t)),         # idx + gates
            pl.BlockSpec((1, TN), lambda t: (0, t)),                 # logsumexp
        ],
    )

    probs_t, meta, lse_row = pl.pallas_call(
        _eplb_router_kernel,
        out_shape=(jax.ShapeDtypeStruct((E, N_pad), jnp.float32),
                   jax.ShapeDtypeStruct((2 * TOP_K, N_pad), jnp.float32),
                   jax.ShapeDtypeStruct((1, N_pad), jnp.float32)),
        grid_spec=grid_spec,
        compiler_params=pltpu.CompilerParams(
            dimension_semantics=("parallel",),
            vmem_limit_bytes=32 * 1024 * 1024),
    )(x, params["w1"], col(params["b1"]), params["w2"], col(params["b2"]), w3, b3)

    # padded tail columns contain garbage -> always slice to :N before any use
    probs_t = probs_t[:, :N]                                         # [E, N]
    idx = meta[:TOP_K, :N].astype(jnp.int32)                         # [TOP_K, N]
    gates = meta[TOP_K:2 * TOP_K, :N]                                # [TOP_K, N]
    lse = lse_row[0, :N]                                             # [N]

    router_probs = probs_t.T.reshape(B, S, E)

    # reconstruct one-hot dispatch / combine planes from (indices, gates)
    disp_rank = jax.nn.one_hot(idx, E, dtype=jnp.float32, axis=1)    # [TOP_K, E, N]
    comb_rank = disp_rank * gates[:, None, :]                        # [TOP_K, E, N]

    # ---- capacity-slot assignment (exact PyTorch scatter semantics) ---------
    # torch's `expert_count[idx] += 1` does NOT accumulate over duplicate indices,
    # so an expert's count rises by at most 1 per top-k rank and the capacity slot
    # depends only on (rank, expert) -> a tiny [TOP_K, E, C] einsum, no scatter.
    capacity = int(B * S * CAPACITY_FACTOR * TOP_K / NUM_EXPERTS)
    counts_rank = jnp.sum(disp_rank, axis=2)                         # [TOP_K, E]
    cap_iota = jnp.arange(capacity, dtype=jnp.int32)                 # [C]
    count = jnp.zeros((E,), jnp.int32)
    slot_oh = []
    for i in range(TOP_K):
        keep_i = count < capacity                                    # [E] bool
        appears_i = (counts_rank[i] > 0.0) & keep_i
        slot_oh.append(((cap_iota[None, :] == count[:, None])
                        & keep_i[:, None]).astype(jnp.float32))      # [E, C]
        count = count + appears_i.astype(jnp.int32)
    slot_oh = jnp.stack(slot_oh)                                     # [TOP_K, E, C]

    dispatch = jnp.einsum("ren,rec->nec", disp_rank, slot_oh).reshape(
        B, S, E, capacity)
    combine = jnp.einsum("ren,rec->nec", comb_rank, slot_oh).reshape(
        B, S, E, capacity)

    # ---- aux loss (balance KL + z-loss), finalized here so the grid stays parallel
    expert_usage = jnp.sum(counts_rank, axis=0) / float(N * TOP_K)
    uniform = 1.0 / NUM_EXPERTS
    balance_loss = jnp.sum(uniform * (jnp.log(uniform)
                                      - jnp.log(expert_usage + 1e-8)))
    z_loss = jnp.mean(lse ** 2)
    aux_loss = BALANCE_COEFFICIENT * balance_loss + Z_LOSS_COEFFICIENT * z_loss

    return dispatch, combine, router_probs, aux_loss


def eplb_router_forward(hidden_states, params, expert_mask=None,
                        expert_weights=None):
    if expert_mask is None:
        expert_mask = jnp.ones((NUM_EXPERTS,), jnp.float32)
    if expert_weights is None:
        expert_weights = jnp.ones((NUM_EXPERTS,), jnp.float32)   # buffer init value
    return _forward_impl(hidden_states, params, expert_mask, expert_weights)


# ------------------------- deterministic parameters --------------------------
def make_params(key):
    """Torch-Linear-style parameters: weight [out, in], bias [out]."""
    def linear(k, out_dim, in_dim):
        kw, kb = jax.random.split(k)
        bound = 1.0 / float(np.sqrt(in_dim))
        w = jax.random.uniform(kw, (out_dim, in_dim), jnp.float32, -bound, bound)
        b = jax.random.uniform(kb, (out_dim,), jnp.float32, -bound, bound)
        return w, b
    k1, k2, k3 = jax.random.split(key, 3)
    w1, b1 = linear(k1, 2 * HIDDEN, HIDDEN)
    w2, b2 = linear(k2, HIDDEN, 2 * HIDDEN)
    w3, b3 = linear(k3, NUM_EXPERTS, HIDDEN)
    return {"w1": w1, "b1": b1, "w2": w2, "b2": b2, "w3": w3, "b3": b3}


# ------------------------------ plain-JAX reference --------------------------
def reference_forward(hidden_states, params, expert_mask=None,
                      expert_weights=None):
    """Faithful re-implementation of EPLBRouter.forward (eval mode)."""
    B, S, H = hidden_states.shape
    N = B * S
    E = NUM_EXPERTS
    if expert_weights is None:
        expert_weights = jnp.ones((E,), jnp.float32)

    x = hidden_states.astype(jnp.float32)
    h1 = _gelu(x @ params["w1"].T + params["b1"], _true_recip)
    h2 = _gelu(h1 @ params["w2"].T + params["b2"], _true_recip)
    logits = h2 @ params["w3"].T + params["b3"]
    logits = logits / TEMPERATURE
    logits = logits * expert_weights[None, None, :]
    if expert_mask is not None:
        logits = logits + (1.0 - expert_mask)[None, None, :] * -1e9

    probs = jax.nn.softmax(logits, axis=-1)
    topv, topi = lax.top_k(probs, TOP_K)
    topn = topv / jnp.sum(topv, axis=-1, keepdims=True)

    capacity = int(B * S * CAPACITY_FACTOR * TOP_K / NUM_EXPERTS)
    topi_f = np.asarray(topi).reshape(N, TOP_K)
    topn_f = np.asarray(topn).reshape(N, TOP_K)

    dispatch = np.zeros((N, E, capacity), np.float32)
    combine = np.zeros((N, E, capacity), np.float32)
    expert_count = np.zeros(E, np.int64)
    for i in range(TOP_K):
        eidx = topi_f[:, i]
        prob = topn_f[:, i]
        keep = expert_count[eidx] < capacity
        pos = expert_count[eidx]
        sel = np.nonzero(keep)[0]
        dispatch[sel, eidx[sel], pos[sel]] = 1.0
        combine[sel, eidx[sel], pos[sel]] = prob[sel]
        expert_count[np.unique(eidx[sel])] += 1   # torch's non-accumulating `+= 1`
    dispatch = dispatch.reshape(B, S, E, capacity)
    combine = combine.reshape(B, S, E, capacity)

    usage = np.zeros(E, np.float64)
    for e in range(E):
        usage[e] = float((topi_f == e).sum())
    usage /= float(N * TOP_K)
    uniform = 1.0 / E
    balance_loss = np.sum(uniform * (np.log(uniform) - np.log(usage + 1e-8)))
    lse = jax.scipy.special.logsumexp(logits, axis=-1)
    z_loss = float(jnp.mean(lse ** 2))
    aux = BALANCE_COEFFICIENT * balance_loss + Z_LOSS_COEFFICIENT * z_loss
    return dispatch, combine, np.asarray(probs), float(aux)


# ---------------------------------- main --------------------------------------
if __name__ == "__main__":
    key = jax.random.PRNGKey(0)
    k_params, k_x = jax.random.split(key)

    B, S = 2, 8
    params = make_params(k_params)
    hidden_states = jax.random.normal(k_x, (B, S, HIDDEN), jnp.float32)

    masks = [None, jnp.array([1, 1, 1, 0, 1, 1, 1, 1], jnp.float32)]
    for mask in masks:
        dispatch, combine, router_probs, aux_loss = eplb_router_forward(
            hidden_states, params, expert_mask=mask)
        jax.block_until_ready((dispatch, combine, router_probs, aux_loss))

        r_disp, r_comb, r_probs, r_aux = reference_forward(
            hidden_states, params, expert_mask=mask)
        assert np.allclose(np.asarray(router_probs), r_probs, atol=1e-4, rtol=1e-4)
        assert np.allclose(np.asarray(dispatch), r_disp, atol=1e-6)
        assert np.allclose(np.asarray(combine), r_comb, atol=1e-4, rtol=1e-4)
        assert abs(float(aux_loss) - r_aux) < 1e-4

    print("KERNEL_OK")
</pallas_src>

<mosaic_0001>
module attributes {stable_mosaic.version = 11 : i64} {
  func.func @_eplb_router_kernel(%arg0: i32, %arg1: memref<128x32xf32, #tpu.memory_space<vmem>>, %arg2: memref<64x32xf32, #tpu.memory_space<vmem>>, %arg3: memref<64x1xf32, #tpu.memory_space<vmem>>, %arg4: memref<32x64xf32, #tpu.memory_space<vmem>>, %arg5: memref<32x1xf32, #tpu.memory_space<vmem>>, %arg6: memref<8x32xf32, #tpu.memory_space<vmem>>, %arg7: memref<8x1xf32, #tpu.memory_space<vmem>>, %arg8: memref<8x128xf32, #tpu.memory_space<vmem>>, %arg9: memref<4x128xf32, #tpu.memory_space<vmem>>, %arg10: memref<1x128xf32, #tpu.memory_space<vmem>>) attributes {dimension_semantics = [#tpu.dimension_semantics<parallel>], iteration_bounds = array<i64: 1>, scalar_prefetch = 0 : i64, scratch_operands = 0 : i64, tpu.core_type = #tpu.core_type<tc>, window_params = [{transform_indices = @transform_0, window_bounds = array<i64: 128, 32>}, {pipeline_mode = #tpu.pipeline_mode<synchronous>, transform_indices = @transform_1, window_bounds = array<i64: 64, 32>}, {pipeline_mode = #tpu.pipeline_mode<synchronous>, transform_indices = @transform_2, window_bounds = array<i64: 64, 1>}, {pipeline_mode = #tpu.pipeline_mode<synchronous>, transform_indices = @transform_3, window_bounds = array<i64: 32, 64>}, {pipeline_mode = #tpu.pipeline_mode<synchronous>, transform_indices = @transform_4, window_bounds = array<i64: 32, 1>}, {pipeline_mode = #tpu.pipeline_mode<synchronous>, transform_indices = @transform_5, window_bounds = array<i64: 8, 32>}, {pipeline_mode = #tpu.pipeline_mode<synchronous>, transform_indices = @transform_6, window_bounds = array<i64: 8, 1>}, {transform_indices = @transform_7, window_bounds = array<i64: 8, 128>}, {transform_indices = @transform_8, window_bounds = array<i64: 4, 128>}, {transform_indices = @transform_9, window_bounds = array<i64: 1, 128>}]} {
    %c0 = arith.constant 0 : index
    %c0_0 = arith.constant 0 : index
    %0 = vector.load %arg1[%c0, %c0_0] : memref<128x32xf32, #tpu.memory_space<vmem>>, vector<128x32xf32>
    %c0_1 = arith.constant 0 : index
    %c0_2 = arith.constant 0 : index
    %1 = vector.load %arg2[%c0_1, %c0_2] : memref<64x32xf32, #tpu.memory_space<vmem>>, vector<64x32xf32>
    %cst = arith.constant dense<0.000000e+00> : vector<64x128xf32>
    %2 = tpu.matmul %1, %0, %cst {dimension_numbers = #tpu.dot_dimension_numbers<[1], [1], [0], [0], [0, 0, 1, 0], [], []>} : vector<64x32xf32>, vector<128x32xf32>, vector<64x128xf32> -> vector<64x128xf32>
    %c0_3 = arith.constant 0 : index
    %c0_4 = arith.constant 0 : index
    %3 = vector.load %arg3[%c0_3, %c0_4] : memref<64x1xf32, #tpu.memory_space<vmem>>, vector<64x1xf32>
    %4 = vector.broadcast %3 : vector<64x1xf32> to vector<64x128xf32>
    %5 = arith.addf %2, %4 : vector<64x128xf32>
    %cst_5 = arith.constant 5.000000e-01 : f32
    %6 = vector.broadcast %cst_5 : f32 to vector<64x128xf32>
    %7 = arith.mulf %6, %5 : vector<64x128xf32>
    %cst_6 = arith.constant 0.707106769 : f32
    %8 = vector.broadcast %cst_6 : f32 to vector<64x128xf32>
    %9 = arith.mulf %5, %8 : vector<64x128xf32>
    %10 = math.absf %9 : vector<64x128xf32>
    %cst_7 = arith.constant 0.327591091 : f32
    %11 = vector.broadcast %cst_7 : f32 to vector<64x128xf32>
    %12 = arith.mulf %11, %10 : vector<64x128xf32>
    %cst_8 = arith.constant 1.000000e+00 : f32
    %13 = vector.broadcast %cst_8 : f32 to vector<64x128xf32>
    %14 = arith.addf %13, %12 : vector<64x128xf32>
    %15 = tpu.reciprocal %14 {approx = true} : vector<64x128xf32> -> vector<64x128xf32>
    %16 = arith.mulf %14, %15 : vector<64x128xf32>
    %cst_9 = arith.constant 2.000000e+00 : f32
    %17 = vector.broadcast %cst_9 : f32 to vector<64x128xf32>
    %18 = arith.subf %17, %16 : vector<64x128xf32>
    %19 = arith.mulf %15, %18 : vector<64x128xf32>
    %cst_10 = arith.constant 1.06140542 : f32
    %20 = vector.broadcast %cst_10 : f32 to vector<64x128xf32>
    %21 = arith.mulf %19, %20 : vector<64x128xf32>
    %cst_11 = arith.constant -1.45315206 : f32
    %22 = vector.broadcast %cst_11 : f32 to vector<64x128xf32>
    %23 = arith.addf %22, %21 : vector<64x128xf32>
    %24 = arith.mulf %19, %23 : vector<64x128xf32>
    %cst_12 = arith.constant 1.42141378 : f32
    %25 = vector.broadcast %cst_12 : f32 to vector<64x128xf32>
    %26 = arith.addf %25, %24 : vector<64x128xf32>
    %27 = arith.mulf %19, %26 : vector<64x128xf32>
    %cst_13 = arith.constant -0.284496725 : f32
    %28 = vector.broadcast %cst_13 : f32 to vector<64x128xf32>
    %29 = arith.addf %28, %27 : vector<64x128xf32>
    %30 = arith.mulf %19, %29 : vector<64x128xf32>
    %cst_14 = arith.constant 0.254829586 : f32
    %31 = vector.broadcast %cst_14 : f32 to vector<64x128xf32>
    %32 = arith.addf %31, %30 : vector<64x128xf32>
    %33 = arith.mulf %19, %32 : vector<64x128xf32>
    %cst_15 = arith.constant 0.000000e+00 : f32
    %34 = vector.broadcast %cst_15 : f32 to vector<64x128xf32>
    %35 = arith.subf %34, %10 : vector<64x128xf32>
    %36 = arith.mulf %35, %10 : vector<64x128xf32>
    %37 = math.exp %36 : vector<64x128xf32>
    %38 = arith.mulf %33, %37 : vector<64x128xf32>
    %cst_16 = arith.constant 1.000000e+00 : f32
    %39 = vector.broadcast %cst_16 : f32 to vector<64x128xf32>
    %40 = arith.subf %39, %38 : vector<64x128xf32>
    %cst_17 = arith.constant 0.000000e+00 : f32
    %41 = vector.broadcast %cst_17 : f32 to vector<64x128xf32>
    %42 = arith.cmpf oge, %9, %41 : vector<64x128xf32>
    %cst_18 = arith.constant 0.000000e+00 : f32
    %43 = vector.broadcast %cst_18 : f32 to vector<64x128xf32>
    %44 = arith.subf %43, %40 : vector<64x128xf32>
    %45 = arith.select %42, %40, %44 : vector<64x128xi1>, vector<64x128xf32>
    %cst_19 = arith.constant 1.000000e+00 : f32
    %46 = vector.broadcast %cst_19 : f32 to vector<64x128xf32>
    %47 = arith.addf %46, %45 : vector<64x128xf32>
    %48 = arith.mulf %7, %47 : vector<64x128xf32>
    %c0_20 = arith.constant 0 : index
    %c0_21 = arith.constant 0 : index
    %49 = vector.load %arg4[%c0_20, %c0_21] : memref<32x64xf32, #tpu.memory_space<vmem>>, vector<32x64xf32>
    %cst_22 = arith.constant dense<0.000000e+00> : vector<32x128xf32>
    %50 = tpu.matmul %49, %48, %cst_22 {dimension_numbers = #tpu.dot_dimension_numbers<[1], [0], [0], [1], [0, 0, 1, 1], [], []>} : vector<32x64xf32>, vector<64x128xf32>, vector<32x128xf32> -> vector<32x128xf32>
    %c0_23 = arith.constant 0 : index
    %c0_24 = arith.constant 0 : index
    %51 = vector.load %arg5[%c0_23, %c0_24] : memref<32x1xf32, #tpu.memory_space<vmem>>, vector<32x1xf32>
    %52 = vector.broadcast %51 : vector<32x1xf32> to vector<32x128xf32>
    %53 = arith.addf %50, %52 : vector<32x128xf32>
    %cst_25 = arith.constant 5.000000e-01 : f32
    %54 = vector.broadcast %cst_25 : f32 to vector<32x128xf32>
    %55 = arith.mulf %54, %53 : vector<32x128xf32>
    %cst_26 = arith.constant 0.707106769 : f32
    %56 = vector.broadcast %cst_26 : f32 to vector<32x128xf32>
    %57 = arith.mulf %53, %56 : vector<32x128xf32>
    %58 = math.absf %57 : vector<32x128xf32>
    %cst_27 = arith.constant 0.327591091 : f32
    %59 = vector.broadcast %cst_27 : f32 to vector<32x128xf32>
    %60 = arith.mulf %59, %58 : vector<32x128xf32>
    %cst_28 = arith.constant 1.000000e+00 : f32
    %61 = vector.broadcast %cst_28 : f32 to vector<32x128xf32>
    %62 = arith.addf %61, %60 : vector<32x128xf32>
    %63 = tpu.reciprocal %62 {approx = true} : vector<32x128xf32> -> vector<32x128xf32>
    %64 = arith.mulf %62, %63 : vector<32x128xf32>
    %cst_29 = arith.constant 2.000000e+00 : f32
    %65 = vector.broadcast %cst_29 : f32 to vector<32x128xf32>
    %66 = arith.subf %65, %64 : vector<32x128xf32>
    %67 = arith.mulf %63, %66 : vector<32x128xf32>
    %cst_30 = arith.constant 1.06140542 : f32
    %68 = vector.broadcast %cst_30 : f32 to vector<32x128xf32>
    %69 = arith.mulf %67, %68 : vector<32x128xf32>
    %cst_31 = arith.constant -1.45315206 : f32
    %70 = vector.broadcast %cst_31 : f32 to vector<32x128xf32>
    %71 = arith.addf %70, %69 : vector<32x128xf32>
    %72 = arith.mulf %67, %71 : vector<32x128xf32>
    %cst_32 = arith.constant 1.42141378 : f32
    %73 = vector.broadcast %cst_32 : f32 to vector<32x128xf32>
    %74 = arith.addf %73, %72 : vector<32x128xf32>
    %75 = arith.mulf %67, %74 : vector<32x128xf32>
    %cst_33 = arith.constant -0.284496725 : f32
    %76 = vector.broadcast %cst_33 : f32 to vector<32x128xf32>
    %77 = arith.addf %76, %75 : vector<32x128xf32>
    %78 = arith.mulf %67, %77 : vector<32x128xf32>
    %cst_34 = arith.constant 0.254829586 : f32
    %79 = vector.broadcast %cst_34 : f32 to vector<32x128xf32>
    %80 = arith.addf %79, %78 : vector<32x128xf32>
    %81 = arith.mulf %67, %80 : vector<32x128xf32>
    %cst_35 = arith.constant 0.000000e+00 : f32
    %82 = vector.broadcast %cst_35 : f32 to vector<32x128xf32>
    %83 = arith.subf %82, %58 : vector<32x128xf32>
    %84 = arith.mulf %83, %58 : vector<32x128xf32>
    %85 = math.exp %84 : vector<32x128xf32>
    %86 = arith.mulf %81, %85 : vector<32x128xf32>
    %cst_36 = arith.constant 1.000000e+00 : f32
    %87 = vector.broadcast %cst_36 : f32 to vector<32x128xf32>
    %88 = arith.subf %87, %86 : vector<32x128xf32>
    %cst_37 = arith.constant 0.000000e+00 : f32
    %89 = vector.broadcast %cst_37 : f32 to vector<32x128xf32>
    %90 = arith.cmpf oge, %57, %89 : vector<32x128xf32>
    %cst_38 = arith.constant 0.000000e+00 : f32
    %91 = vector.broadcast %cst_38 : f32 to vector<32x128xf32>
    %92 = arith.subf %91, %88 : vector<32x128xf32>
    %93 = arith.select %90, %88, %92 : vector<32x128xi1>, vector<32x128xf32>
    %cst_39 = arith.constant 1.000000e+00 : f32
    %94 = vector.broadcast %cst_39 : f32 to vector<32x128xf32>
    %95 = arith.addf %94, %93 : vector<32x128xf32>
    %96 = arith.mulf %55, %95 : vector<32x128xf32>
    %c0_40 = arith.constant 0 : index
    %c0_41 = arith.constant 0 : index
    %97 = vector.load %arg6[%c0_40, %c0_41] : memref<8x32xf32, #tpu.memory_space<vmem>>, vector<8x32xf32>
    %cst_42 = arith.constant dense<0.000000e+00> : vector<8x128xf32>
    %98 = tpu.matmul %97, %96, %cst_42 {dimension_numbers = #tpu.dot_dimension_numbers<[1], [0], [0], [1], [0, 0, 1, 1], [], []>} : vector<8x32xf32>, vector<32x128xf32>, vector<8x128xf32> -> vector<8x128xf32>
    %c0_43 = arith.constant 0 : index
    %c0_44 = arith.constant 0 : index
    %99 = vector.load %arg7[%c0_43, %c0_44] : memref<8x1xf32, #tpu.memory_space<vmem>>, vector<8x1xf32>
    %100 = vector.broadcast %99 : vector<8x1xf32> to vector<8x128xf32>
    %101 = arith.addf %98, %100 : vector<8x128xf32>
    %cst_45 = arith.constant dense<0xFF800000> : vector<128xf32>
    %102 = vector.multi_reduction <maximumf>, %101, %cst_45 [0] : vector<8x128xf32> to vector<128xf32>
    %103 = vector.shape_cast %102 : vector<128xf32> to vector<1x128xf32>
    %104 = vector.broadcast %103 : vector<1x128xf32> to vector<8x128xf32>
    %105 = arith.subf %101, %104 : vector<8x128xf32>
    %106 = math.exp %105 : vector<8x128xf32>
    %cst_46 = arith.constant dense<0.000000e+00> : vector<128xf32>
    %107 = vector.multi_reduction <add>, %106, %cst_46 [0] : vector<8x128xf32> to vector<128xf32>
    %108 = vector.shape_cast %107 : vector<128xf32> to vector<1x128xf32>
    %109 = tpu.reciprocal %108 {approx = true} : vector<1x128xf32> -> vector<1x128xf32>
    %110 = arith.mulf %108, %109 : vector<1x128xf32>
    %cst_47 = arith.constant 2.000000e+00 : f32
    %111 = vector.broadcast %cst_47 : f32 to vector<1x128xf32>
    %112 = arith.subf %111, %110 : vector<1x128xf32>
    %113 = arith.mulf %109, %112 : vector<1x128xf32>
    %114 = vector.broadcast %113 : vector<1x128xf32> to vector<8x128xf32>
    %115 = arith.mulf %106, %114 : vector<8x128xf32>
    %116 = math.log %108 : vector<1x128xf32>
    %117 = arith.addf %103, %116 : vector<1x128xf32>
    %118 = tpu.iota {dimensions = array<i32: 0>} : vector<8x128xi32>
    %119 = arith.sitofp %118 : vector<8x128xi32> to vector<8x128xf32>
    %cst_48 = arith.constant dense<0xFF800000> : vector<128xf32>
    %120 = vector.multi_reduction <maximumf>, %115, %cst_48 [0] : vector<8x128xf32> to vector<128xf32>
    %121 = vector.shape_cast %120 : vector<128xf32> to vector<1x128xf32>
    %122 = vector.broadcast %121 : vector<1x128xf32> to vector<8x128xf32>
    %123 = arith.cmpf oeq, %115, %122 : vector<8x128xf32>
    %cst_49 = arith.constant 8.000000e+00 : f32
    %124 = vector.broadcast %cst_49 : f32 to vector<8x128xf32>
    %125 = arith.select %123, %119, %124 : vector<8x128xi1>, vector<8x128xf32>
    %cst_50 = arith.constant dense<0x7F800000> : vector<128xf32>
    %126 = vector.multi_reduction <minimumf>, %125, %cst_50 [0] : vector<8x128xf32> to vector<128xf32>
    %127 = vector.shape_cast %126 : vector<128xf32> to vector<1x128xf32>
    %128 = vector.broadcast %127 : vector<1x128xf32> to vector<8x128xf32>
    %129 = arith.cmpf oeq, %119, %128 : vector<8x128xf32>
    %cst_51 = arith.constant -1.000000e+00 : f32
    %130 = vector.broadcast %cst_51 : f32 to vector<8x128xf32>
    %131 = arith.select %129, %130, %115 : vector<8x128xi1>, vector<8x128xf32>
    %cst_52 = arith.constant dense<0xFF800000> : vector<128xf32>
    %132 = vector.multi_reduction <maximumf>, %131, %cst_52 [0] : vector<8x128xf32> to vector<128xf32>
    %133 = vector.shape_cast %132 : vector<128xf32> to vector<1x128xf32>
    %134 = vector.broadcast %133 : vector<1x128xf32> to vector<8x128xf32>
    %135 = arith.cmpf oeq, %131, %134 : vector<8x128xf32>
    %cst_53 = arith.constant 8.000000e+00 : f32
    %136 = vector.broadcast %cst_53 : f32 to vector<8x128xf32>
    %137 = arith.select %135, %119, %136 : vector<8x128xi1>, vector<8x128xf32>
    %cst_54 = arith.constant dense<0x7F800000> : vector<128xf32>
    %138 = vector.multi_reduction <minimumf>, %137, %cst_54 [0] : vector<8x128xf32> to vector<128xf32>
    %139 = vector.shape_cast %138 : vector<128xf32> to vector<1x128xf32>
    %140 = arith.addf %121, %133 : vector<1x128xf32>
    %141 = tpu.reciprocal %140 {approx = true} : vector<1x128xf32> -> vector<1x128xf32>
    %142 = arith.mulf %140, %141 : vector<1x128xf32>
    %cst_55 = arith.constant 2.000000e+00 : f32
    %143 = vector.broadcast %cst_55 : f32 to vector<1x128xf32>
    %144 = arith.subf %143, %142 : vector<1x128xf32>
    %145 = arith.mulf %141, %144 : vector<1x128xf32>
    %c0_56 = arith.constant 0 : index
    %c0_57 = arith.constant 0 : index
    %146 = vector.load %arg8[%c0_56, %c0_57] : memref<8x128xf32, #tpu.memory_space<vmem>>, vector<8x128xf32>
    tpu.vector_store %arg8[%c0_56, %c0_57], %115 {strides = array<i32>} : memref<8x128xf32, #tpu.memory_space<vmem>>, vector<8x128xf32>,
    %c0_58 = arith.constant 0 : index
    %c0_59 = arith.constant 0 : index
    %147 = vector.load %arg9[%c0_58, %c0_59] : memref<4x128xf32, #tpu.memory_space<vmem>>, vector<1x128xf32>
    tpu.vector_store %arg9[%c0_58, %c0_59], %127 {strides = array<i32>} : memref<4x128xf32, #tpu.memory_space<vmem>>, vector<1x128xf32>,
    %148 = arith.mulf %121, %145 : vector<1x128xf32>
    %c2 = arith.constant 2 : index
    %c0_60 = arith.constant 0 : index
    %149 = vector.load %arg9[%c2, %c0_60] : memref<4x128xf32, #tpu.memory_space<vmem>>, vector<1x128xf32>
    tpu.vector_store %arg9[%c2, %c0_60], %148 {strides = array<i32>} : memref<4x128xf32, #tpu.memory_space<vmem>>, vector<1x128xf32>,
    %c1 = arith.constant 1 : index
    %c0_61 = arith.constant 0 : index
    %150 = vector.load %arg9[%c1, %c0_61] : memref<4x128xf32, #tpu.memory_space<vmem>>, vector<1x128xf32>
    tpu.vector_store %arg9[%c1, %c0_61], %139 {strides = array<i32>} : memref<4x128xf32, #tpu.memory_space<vmem>>, vector<1x128xf32>,
    %151 = arith.mulf %133, %145 : vector<1x128xf32>
    %c3 = arith.constant 3 : index
    %c0_62 = arith.constant 0 : index
    %152 = vector.load %arg9[%c3, %c0_62] : memref<4x128xf32, #tpu.memory_space<vmem>>, vector<1x128xf32>
    tpu.vector_store %arg9[%c3, %c0_62], %151 {strides = array<i32>} : memref<4x128xf32, #tpu.memory_space<vmem>>, vector<1x128xf32>,
    %c0_63 = arith.constant 0 : index
    %c0_64 = arith.constant 0 : index
    %153 = vector.load %arg10[%c0_63, %c0_64] : memref<1x128xf32, #tpu.memory_space<vmem>>, vector<1x128xf32>
    tpu.vector_store %arg10[%c0_63, %c0_64], %117 {strides = array<i32>} : memref<1x128xf32, #tpu.memory_space<vmem>>, vector<1x128xf32>,
    return
  }
  func.func @transform_0(%arg0: i32) -> (i32, i32) {
    %c0_i32 = arith.constant 0 : i32
    %c0_i32_0 = arith.constant 0 : i32
    return %arg0, %c0_i32 : i32, i32
  }
  func.func @transform_1(%arg0: i32) -> (i32, i32) {
    %c0_i32 = arith.constant 0 : i32
    %c0_i32_0 = arith.constant 0 : i32
    %c0_i32_1 = arith.constant 0 : i32
    return %c0_i32, %c0_i32_0 : i32, i32
  }
  func.func @transform_2(%arg0: i32) -> (i32, i32) {
    %c0_i32 = arith.constant 0 : i32
    %c0_i32_0 = arith.constant 0 : i32
    %c0_i32_1 = arith.constant 0 : i32
    return %c0_i32, %c0_i32_0 : i32, i32
  }
  func.func @transform_3(%arg0: i32) -> (i32, i32) {
    %c0_i32 = arith.constant 0 : i32
    %c0_i32_0 = arith.constant 0 : i32
    %c0_i32_1 = arith.constant 0 : i32
    return %c0_i32, %c0_i32_0 : i32, i32
  }
  func.func @transform_4(%arg0: i32) -> (i32, i32) {
    %c0_i32 = arith.constant 0 : i32
    %c0_i32_0 = arith.constant 0 : i32
    %c0_i32_1 = arith.constant 0 : i32
    return %c0_i32, %c0_i32_0 : i32, i32
  }
  func.func @transform_5(%arg0: i32) -> (i32, i32) {
    %c0_i32 = arith.constant 0 : i32
    %c0_i32_0 = arith.constant 0 : i32
    %c0_i32_1 = arith.constant 0 : i32
    return %c0_i32, %c0_i32_0 : i32, i32
  }
  func.func @transform_6(%arg0: i32) -> (i32, i32) {
    %c0_i32 = arith.constant 0 : i32
    %c0_i32_0 = arith.constant 0 : i32
    %c0_i32_1 = arith.constant 0 : i32
    return %c0_i32, %c0_i32_0 : i32, i32
  }
  func.func @transform_7(%arg0: i32) -> (i32, i32) {
    %c0_i32 = arith.constant 0 : i32
    %c0_i32_0 = arith.constant 0 : i32
    return %c0_i32, %arg0 : i32, i32
  }
  func.func @transform_8(%arg0: i32) -> (i32, i32) {
    %c0_i32 = arith.constant 0 : i32
    %c0_i32_0 = arith.constant 0 : i32
    return %c0_i32, %arg0 : i32, i32
  }
  func.func @transform_9(%arg0: i32) -> (i32, i32) {
    %c0_i32 = arith.constant 0 : i32
    %c0_i32_0 = arith.constant 0 : i32
    return %c0_i32, %arg0 : i32, i32
  }
}

</mosaic_0001>

<llo_original>
// kernel: _forward_impl.1
$region0: #{_forward_impl.1}
  #allocation0 [shape = 'u32[]', space=smem, size = 0x4, offset = 0x4, fixed_abs, tag = 'smem constant byte address 0x4 - core index']
  #allocation1 [shape = 'u32[144,128]{1,0:T(1,128)}', space=vmem, size = 0x12000, scoped, tag = 'internal scratch']
  %s0 = inlined_call_operand.vmem [shape: f32[128,32], index: 0, kind: input, shape index: {}]
  %s1 = inlined_call_operand.vmem [shape: f32[64,32], index: 1, kind: input, shape index: {}]
  %s2 = inlined_call_operand.vmem [shape: f32[64,1], index: 2, kind: input, shape index: {}]
  %s3 = inlined_call_operand.vmem [shape: f32[32,64], index: 3, kind: input, shape index: {}]
  %s4 = inlined_call_operand.vmem [shape: f32[32,1], index: 4, kind: input, shape index: {}]
  %s5 = inlined_call_operand.vmem [shape: f32[8,32], index: 5, kind: input, shape index: {}]
  %s6 = inlined_call_operand.vmem [shape: f32[8,1], index: 6, kind: input, shape index: {}]
  %s7 = inlined_call_operand.vmem [shape: f32[8,128], index: 7, kind: output, shape index: {0}]
  %s8 = inlined_call_operand.vmem [shape: f32[4,128], index: 8, kind: output, shape index: {1}]
  %s9 = inlined_call_operand.vmem [shape: f32[1,128], index: 9, kind: output, shape index: {2}]
  %10 = xla_tuple %s7, %s8, %s9
  %s11 = sld [smem:[#allocation0]]
  $region54: #{_forward_impl.1} parent=0
    _
  %s13 = ssub.s32 1, %s11
  %s14 = scalar_select 0, %s13, %s11
  // Predicated region
  $region2: #{_forward_impl.1} parent=0 // pred_check
    _
  $region3: #{_forward_impl.1} parent=0 // pred_check_branch
    %16 = sbr.rel (0) target = $region5
  $region4: #{_forward_impl.1} parent=0 // pred_region
    _
  $region5: #{_forward_impl.1} parent=0 // pred_fallthru
    _
  // Predicated region
  $region6: #{_forward_impl.1} parent=0 // pred_check
    _
  $region7: #{_forward_impl.1} parent=0 // pred_check_branch
    %18 = sbr.rel (0) target = $region9
  $region8: #{_forward_impl.1} parent=0 // pred_region
    _
  $region9: #{_forward_impl.1} parent=0 // pred_fallthru
    _
  // Predicated region
  $region10: #{_forward_impl.1} parent=0 // pred_check
    _
  $region11: #{_forward_impl.1} parent=0 // pred_check_branch
    %20 = sbr.rel (0) target = $region13
  $region12: #{_forward_impl.1} parent=0 // pred_region
    _
  $region13: #{_forward_impl.1} parent=0 // pred_fallthru
    _
  // Predicated region
  $region14: #{_forward_impl.1} parent=0 // pred_check
    _
  $region15: #{_forward_impl.1} parent=0 // pred_check_branch
    %22 = sbr.rel (0) target = $region17
  $region16: #{_forward_impl.1} parent=0 // pred_region
    _
  $region17: #{_forward_impl.1} parent=0 // pred_fallthru
    _
  // Predicated region
  $region18: #{_forward_impl.1} parent=0 // pred_check
    _
  $region19: #{_forward_impl.1} parent=0 // pred_check_branch
    %24 = sbr.rel (0) target = $region21
  $region20: #{_forward_impl.1} parent=0 // pred_region
    _
  $region21: #{_forward_impl.1} parent=0 // pred_fallthru
    _
  // Predicated region
  $region22: #{_forward_impl.1} parent=0 // pred_check
    _
  $region23: #{_forward_impl.1} parent=0 // pred_check_branch
    %26 = sbr.rel (0) target = $region25
  $region24: #{_forward_impl.1} parent=0 // pred_region
    _
  $region25: #{_forward_impl.1} parent=0 // pred_fallthru
    _
  // Predicated region
  $region26: #{_forward_impl.1} parent=0 // pred_check
    _
  $region27: #{_forward_impl.1} parent=0 // pred_check_branch
    %28 = sbr.rel (0) target = $region29
  $region28: #{_forward_impl.1} parent=0 // pred_region
    _
  $region29: #{_forward_impl.1} parent=0 // pred_fallthru
    _
  %v29 = vld [vmem:[%s0] sm:$0xff]
  %v30 = vld [vmem:[%s0 + $0x8] sm:$0xff]
  %v31 = vld [vmem:[%s0 + $0x10] sm:$0xff]
  %v32 = vld [vmem:[%s0 + $0x18] sm:$0xff]
  %v33 = vld [vmem:[%s0 + $0x20] sm:$0xff]
  %v34 = vld [vmem:[%s0 + $0x28] sm:$0xff]
  %v35 = vld [vmem:[%s0 + $0x30] sm:$0xff]
  %v36 = vld [vmem:[%s0 + $0x38] sm:$0xff]
  %v37 = vld [vmem:[%s0 + $0x40] sm:$0xff]
  %v38 = vld [vmem:[%s0 + $0x48] sm:$0xff]
  %v39 = vld [vmem:[%s0 + $0x50] sm:$0xff]
  %v40 = vld [vmem:[%s0 + $0x58] sm:$0xff]
  %v41 = vld [vmem:[%s0 + $0x60] sm:$0xff]
  %v42 = vld [vmem:[%s0 + $0x68] sm:$0xff]
  %v43 = vld [vmem:[%s0 + $0x70] sm:$0xff]
  %v44 = vld [vmem:[%s0 + $0x78] sm:$0xff]
  %v45 = vld [vmem:[%s1] sm:$0xff]
  %v46 = vld [vmem:[%s1 + $0x8] sm:$0xff]
  %v47 = vld [vmem:[%s1 + $0x10] sm:$0xff]
  %v48 = vld [vmem:[%s1 + $0x18] sm:$0xff]
  %v49 = vld [vmem:[%s1 + $0x20] sm:$0xff]
  %v50 = vld [vmem:[%s1 + $0x28] sm:$0xff]
  %v51 = vld [vmem:[%s1 + $0x30] sm:$0xff]
  %v52 = vld [vmem:[%s1 + $0x38] sm:$0xff]
  %v53 = vld [vmem:[%s2] sm:$0xff]
  %v54 = vld [vmem:[%s2 + $0x8] sm:$0xff]
  %v55 = vld [vmem:[%s2 + $0x10] sm:$0xff]
  %v56 = vld [vmem:[%s2 + $0x18] sm:$0xff]
  %v57 = vld [vmem:[%s2 + $0x20] sm:$0xff]
  %v58 = vld [vmem:[%s2 + $0x28] sm:$0xff]
  %v59 = vld [vmem:[%s2 + $0x30] sm:$0xff]
  %v60 = vld [vmem:[%s2 + $0x38] sm:$0xff]
  %62 = vset.pattern.permute.xlu0 0
  %63 = vperm.xlu0 %62, %v53
  %v64 = vpop.permute.xlu0 %63
  %67 = vset.pattern.permute.xlu0 0
  %68 = vperm.xlu0 %67, %v54
  %v69 = vpop.permute.xlu0 %68
  %72 = vset.pattern.permute.xlu0 0
  %73 = vperm.xlu0 %72, %v55
  %v74 = vpop.permute.xlu0 %73
  %77 = vset.pattern.permute.xlu0 0
  %78 = vperm.xlu0 %77, %v56
  %v79 = vpop.permute.xlu0 %78
  %82 = vset.pattern.permute.xlu0 0
  %83 = vperm.xlu0 %82, %v57
  %v84 = vpop.permute.xlu0 %83
  %87 = vset.pattern.permute.xlu0 0
  %88 = vperm.xlu0 %87, %v58
  %v89 = vpop.permute.xlu0 %88
  %92 = vset.pattern.permute.xlu0 0
  %93 = vperm.xlu0 %92, %v59
  %v94 = vpop.permute.xlu0 %93
  %97 = vset.pattern.permute.xlu0 0
  %98 = vperm.xlu0 %97, %v60
  %v99 = vpop.permute.xlu0 %98
  %vm101 = vcmask 261120
  %v103 = vsel %vm101, %v45, 0
  %v106 = vsel %vm101, %v46, 0
  %v109 = vsel %vm101, %v47, 0
  %v112 = vsel %vm101, %v48, 0
  %v115 = vsel %vm101, %v49, 0
  %v118 = vsel %vm101, %v50, 0
  %v121 = vsel %vm101, %v51, 0
  %v124 = vsel %vm101, %v52, 0
  %v127 = vsel %vm101, %v29, 0
  %v130 = vsel %vm101, %v30, 0
  %v133 = vsel %vm101, %v31, 0
  %v136 = vsel %vm101, %v32, 0
  %v139 = vsel %vm101, %v33, 0
  %v142 = vsel %vm101, %v34, 0
  %v145 = vsel %vm101, %v35, 0
  %v148 = vsel %vm101, %v36, 0
  %v151 = vsel %vm101, %v37, 0
  %v154 = vsel %vm101, %v38, 0
  %v157 = vsel %vm101, %v39, 0
  %v160 = vsel %vm101, %v40, 0
  %v163 = vsel %vm101, %v41, 0
  %v166 = vsel %vm101, %v42, 0
  %v169 = vsel %vm101, %v43, 0
  %v172 = vsel %vm101, %v44, 0
  %174 = vmatprep.subr.mxu0 0.0
  %175 = vmatpush1.xpose.msra.mxu0 %v127
  %176 = vmatprep.subr.mxu0 0.0
  %177 = vmatpush1.xpose.msra.mxu0 %v130
  %178 = vmatprep.subr.mxu0 0.0
  %179 = vmatpush1.xpose.msra.mxu0 %v133
  %180 = vmatprep.subr.mxu0 0.0
  %181 = vmatpush1.xpose.msra.mxu0 %v136
  %182 = vmatprep.subr.mxu0 0.0
  %183 = vmatpush1.xpose.msra.mxu0 %v139
  %184 = vmatprep.subr.mxu0 0.0
  %185 = vmatpush1.xpose.msra.mxu0 %v142
  %186 = vmatprep.subr.mxu0 0.0
  %187 = vmatpush1.xpose.msra.mxu0 %v145
  %188 = vmatprep.subr.mxu0 0.0
  %189 = vmatpush1.xpose.msra.mxu0 %v148
  %190 = vmatprep.subr.mxu0 0.0
  %191 = vmatpush1.xpose.msra.mxu0 %v151
  %192 = vmatprep.subr.mxu0 0.0
  %193 = vmatpush1.xpose.msra.mxu0 %v154
  %194 = vmatprep.subr.mxu0 0.0
  %195 = vmatpush1.xpose.msra.mxu0 %v157
  %196 = vmatprep.subr.mxu0 0.0
  %197 = vmatpush1.xpose.msra.mxu0 %v160
  %198 = vmatprep.subr.mxu0 0.0
  %199 = vmatpush1.xpose.msra.mxu0 %v163
  %200 = vmatprep.subr.mxu0 0.0
  %201 = vmatpush1.xpose.msra.mxu0 %v166
  %202 = vmatprep.subr.mxu0 0.0
  %203 = vmatpush1.xpose.msra.mxu0 %v169
  %204 = vmatprep.subr.mxu0 0.0
  %205 = vmatpush1.xpose.msra.mxu0 %v172
  %206 = vmatprep.subr.mxu0 0.0
  %207 = vmatpush1.xpose.msra.mxu0 0.0
  %208 = vmatprep.subr.mxu0 0.0
  %209 = vmatpush1.xpose.msra.mxu0 0.0
  %210 = vmatprep.subr.mxu0 0.0
  %211 = vmatpush1.xpose.msra.mxu0 0.0
  %212 = vmatprep.subr.mxu0 0.0
  %213 = vmatpush1.xpose.msra.mxu0 0.0
  %214 = vmatprep.subr.mxu0 0.0
  %215 = vmatpush1.xpose.msra.mxu0 0.0
  %216 = vmatprep.subr.mxu0 0.0
  %217 = vmatpush1.xpose.msra.mxu0 0.0
  %218 = vmatprep.subr.mxu0 0.0
  %219 = vmatpush1.xpose.msra.mxu0 0.0
  %220 = vmatprep.subr.mxu0 0.0
  %221 = vmatpush1.xpose.msra.mxu0 0.0
  %222 = vmatprep.subr.mxu0 0.0
  %223 = vmatpush1.xpose.msra.mxu0 0.0
  %224 = vmatprep.subr.mxu0 0.0
  %225 = vmatpush1.xpose.msra.mxu0 0.0
  %226 = vmatprep.subr.mxu0 0.0
  %227 = vmatpush1.xpose.msra.mxu0 0.0
  %228 = vmatprep.subr.mxu0 0.0
  %229 = vmatpush1.xpose.msra.mxu0 0.0
  %230 = vmatprep.subr.mxu0 0.0
  %231 = vmatpush1.xpose.msra.mxu0 0.0
  %232 = vmatprep.subr.mxu0 0.0
  %233 = vmatpush1.xpose.msra.mxu0 0.0
  %234 = vmatprep.subr.mxu0 0.0
  %235 = vmatpush1.xpose.msra.mxu0 0.0
  %236 = vmatprep.subr.mxu0 0.0
  %237 = vmatpush1.xpose.msra.mxu0 0.0
  %238 = vmatprep.mubr.f32.mxu0 0.0
  %239 = vmatmul.mubr.f32.gmra.mrb[0].mxu0 %v103
  %v240 = vpop.f32.mrb[0].mxu0
  %v241 = vadd.f32 %v64, %v240
  %v242 = vpop.f32.mrb[0].mxu0
  %243 = vmatprep.mubr.f32.mxu0 0.0
  %244 = vmatmul.mubr.f32.gmra.mrb[0].mxu0 %v106
  %v245 = vpop.f32.mrb[0].mxu0
  %v246 = vadd.f32 %v69, %v245
  %v247 = vpop.f32.mrb[0].mxu0
  %248 = vmatprep.mubr.f32.mxu0 0.0
  %249 = vmatmul.mubr.f32.gmra.mrb[0].mxu0 %v109
  %v250 = vpop.f32.mrb[0].mxu0
  %v251 = vadd.f32 %v74, %v250
  %v252 = vpop.f32.mrb[0].mxu0
  %253 = vmatprep.mubr.f32.mxu0 0.0
  %254 = vmatmul.mubr.f32.gmra.mrb[0].mxu0 %v112
  %v255 = vpop.f32.mrb[0].mxu0
  %v256 = vadd.f32 %v79, %v255
  %v257 = vpop.f32.mrb[0].mxu0
  %258 = vmatprep.mubr.f32.mxu0 0.0
  %259 = vmatmul.mubr.f32.gmra.mrb[0].mxu0 %v115
  %v260 = vpop.f32.mrb[0].mxu0
  %v261 = vadd.f32 %v84, %v260
  %v262 = vpop.f32.mrb[0].mxu0
  %263 = vmatprep.mubr.f32.mxu0 0.0
  %264 = vmatmul.mubr.f32.gmra.mrb[0].mxu0 %v118
  %v265 = vpop.f32.mrb[0].mxu0
  %v266 = vadd.f32 %v89, %v265
  %v267 = vpop.f32.mrb[0].mxu0
  %268 = vmatprep.mubr.f32.mxu0 0.0
  %269 = vmatmul.mubr.f32.gmra.mrb[0].mxu0 %v121
  %v270 = vpop.f32.mrb[0].mxu0
  %v271 = vadd.f32 %v94, %v270
  %v272 = vpop.f32.mrb[0].mxu0
  %273 = vmatprep.mubr.f32.mxu0 0.0
  %274 = vmatmul.mubr.f32.gmra.mrb[0].mxu0 %v124
  %v275 = vpop.f32.mrb[0].mxu0
  %v276 = vadd.f32 %v99, %v275
  %v277 = vpop.f32.mrb[0].mxu0
  %278 = vdwg.mxu0
  %v279 = vmul.f32 %v241, 0.5
  %v280 = vmul.f32 %v246, 0.5
  %v281 = vmul.f32 %v251, 0.5
  %v282 = vmul.f32 %v256, 0.5
  %v283 = vmul.f32 %v261, 0.5
  %v284 = vmul.f32 %v266, 0.5
  %v285 = vmul.f32 %v271, 0.5
  %v286 = vmul.f32 %v276, 0.5
  %v287 = vmul.f32 %v241, 0.70710677
  %v288 = vmul.f32 %v246, 0.70710677
  %v289 = vmul.f32 %v251, 0.70710677
  %v290 = vmul.f32 %v256, 0.70710677
  %v291 = vmul.f32 %v261, 0.70710677
  %v292 = vmul.f32 %v266, 0.70710677
  %v293 = vmul.f32 %v271, 0.70710677
  %v294 = vmul.f32 %v276, 0.70710677
  %v295 = vand.u32 2147483647, %v287
  %v296 = vand.u32 2147483647, %v288
  %v297 = vand.u32 2147483647, %v289
  %v298 = vand.u32 2147483647, %v290
  %v299 = vand.u32 2147483647, %v291
  %v300 = vand.u32 2147483647, %v292
  %v301 = vand.u32 2147483647, %v293
  %v302 = vand.u32 2147483647, %v294
  %v303 = vmul.f32 %v295, 0.3275911
  %v304 = vmul.f32 %v296, 0.3275911
  %v305 = vmul.f32 %v297, 0.3275911
  %v306 = vmul.f32 %v298, 0.3275911
  %v307 = vmul.f32 %v299, 0.3275911
  %v308 = vmul.f32 %v300, 0.3275911
  %v309 = vmul.f32 %v301, 0.3275911
  %v310 = vmul.f32 %v302, 0.3275911
  %v311 = vadd.f32 %v303, 1.0
  %v312 = vadd.f32 %v304, 1.0
  %v313 = vadd.f32 %v305, 1.0
  %v314 = vadd.f32 %v306, 1.0
  %v315 = vadd.f32 %v307, 1.0
  %v316 = vadd.f32 %v308, 1.0
  %v317 = vadd.f32 %v309, 1.0
  %v318 = vadd.f32 %v310, 1.0
  %v319 = vrcp.pop %v311
  %v320 = vrcp.pop %v312
  %v321 = vrcp.pop %v313
  %v322 = vrcp.pop %v314
  %v323 = vrcp.pop %v315
  %v324 = vrcp.pop %v316
  %v325 = vrcp.pop %v317
  %v326 = vrcp.pop %v318
  %v327 = vmul.f32 %v311, %v319
  %v328 = vmul.f32 %v312, %v320
  %v329 = vmul.f32 %v313, %v321
  %v330 = vmul.f32 %v314, %v322
  %v331 = vmul.f32 %v315, %v323
  %v332 = vmul.f32 %v316, %v324
  %v333 = vmul.f32 %v317, %v325
  %v334 = vmul.f32 %v318, %v326
  %v335 = vsub.f32 2.0, %v327
  %v336 = vsub.f32 2.0, %v328
  %v337 = vsub.f32 2.0, %v329
  %v338 = vsub.f32 2.0, %v330
  %v339 = vsub.f32 2.0, %v331
  %v340 = vsub.f32 2.0, %v332
  %v341 = vsub.f32 2.0, %v333
  %v342 = vsub.f32 2.0, %v334
  %v343 = vmul.f32 %v319, %v335
  %v344 = vmul.f32 %v320, %v336
  %v345 = vmul.f32 %v321, %v337
  %v346 = vmul.f32 %v322, %v338
  %v347 = vmul.f32 %v323, %v339
  %v348 = vmul.f32 %v324, %v340
  %v349 = vmul.f32 %v325, %v341
  %v350 = vmul.f32 %v326, %v342
  %v351 = vmul.f32 %v343, 1.0614054
  %v352 = vmul.f32 %v344, 1.0614054
  %v353 = vmul.f32 %v345, 1.0614054
  %v354 = vmul.f32 %v346, 1.0614054
  %v355 = vmul.f32 %v347, 1.0614054
  %v356 = vmul.f32 %v348, 1.0614054
  %v357 = vmul.f32 %v349, 1.0614054
  %v358 = vmul.f32 %v350, 1.0614054
  %v359 = vadd.f32 %v351, -1.4531521
  %v360 = vadd.f32 %v352, -1.4531521
  %v361 = vadd.f32 %v353, -1.4531521
  %v362 = vadd.f32 %v354, -1.4531521
  %v363 = vadd.f32 %v355, -1.4531521
  %v364 = vadd.f32 %v356, -1.4531521
  %v365 = vadd.f32 %v357, -1.4531521
  %v366 = vadd.f32 %v358, -1.4531521
  %v367 = vmul.f32 %v343, %v359
  %v368 = vmul.f32 %v344, %v360
  %v369 = vmul.f32 %v345, %v361
  %v370 = vmul.f32 %v346, %v362
  %v371 = vmul.f32 %v347, %v363
  %v372 = vmul.f32 %v348, %v364
  %v373 = vmul.f32 %v349, %v365
  %v374 = vmul.f32 %v350, %v366
  %v375 = vadd.f32 %v367, 1.4214138
  %v376 = vadd.f32 %v368, 1.4214138
  %v377 = vadd.f32 %v369, 1.4214138
  %v378 = vadd.f32 %v370, 1.4214138
  %v379 = vadd.f32 %v371, 1.4214138
  %v380 = vadd.f32 %v372, 1.4214138
  %v381 = vadd.f32 %v373, 1.4214138
  %v382 = vadd.f32 %v374, 1.4214138
  %v383 = vmul.f32 %v343, %v375
  %v384 = vmul.f32 %v344, %v376
  %v385 = vmul.f32 %v345, %v377
  %v386 = vmul.f32 %v346, %v378
  %v387 = vmul.f32 %v347, %v379
  %v388 = vmul.f32 %v348, %v380
  %v389 = vmul.f32 %v349, %v381
  %v390 = vmul.f32 %v350, %v382
  %v391 = vadd.f32 %v383, -0.28449672
  %v392 = vadd.f32 %v384, -0.28449672
  %v393 = vadd.f32 %v385, -0.28449672
  %v394 = vadd.f32 %v386, -0.28449672
  %v395 = vadd.f32 %v387, -0.28449672
  %v396 = vadd.f32 %v388, -0.28449672
  %v397 = vadd.f32 %v389, -0.28449672
  %v398 = vadd.f32 %v390, -0.28449672
  %v399 = vmul.f32 %v343, %v391
  %v400 = vmul.f32 %v344, %v392
  %v401 = vmul.f32 %v345, %v393
  %v402 = vmul.f32 %v346, %v394
  %v403 = vmul.f32 %v347, %v395
  %v404 = vmul.f32 %v348, %v396
  %v405 = vmul.f32 %v349, %v397
  %v406 = vmul.f32 %v350, %v398
  %v407 = vadd.f32 %v399, 0.2548296
  %v408 = vadd.f32 %v400, 0.2548296
  %v409 = vadd.f32 %v401, 0.2548296
  %v410 = vadd.f32 %v402, 0.2548296
  %v411 = vadd.f32 %v403, 0.2548296
  %v412 = vadd.f32 %v404, 0.2548296
  %v413 = vadd.f32 %v405, 0.2548296
  %v414 = vadd.f32 %v406, 0.2548296
  %v415 = vmul.f32 %v343, %v407
  %v416 = vmul.f32 %v344, %v408
  %v417 = vmul.f32 %v345, %v409
  %v418 = vmul.f32 %v346, %v410
  %v419 = vmul.f32 %v347, %v411
  %v420 = vmul.f32 %v348, %v412
  %v421 = vmul.f32 %v349, %v413
  %v422 = vmul.f32 %v350, %v414
  %v423 = vsub.f32 0.0, %v295
  %v424 = vsub.f32 0.0, %v296
  %v425 = vsub.f32 0.0, %v297
  %v426 = vsub.f32 0.0, %v298
  %v427 = vsub.f32 0.0, %v299
  %v428 = vsub.f32 0.0, %v300
  %v429 = vsub.f32 0.0, %v301
  %v430 = vsub.f32 0.0, %v302
  %v431 = vmul.f32 %v423, %v295
  %v432 = vmul.f32 %v424, %v296
  %v433 = vmul.f32 %v425, %v297
  %v434 = vmul.f32 %v426, %v298
  %v435 = vmul.f32 %v427, %v299
  %v436 = vmul.f32 %v428, %v300
  %v437 = vmul.f32 %v429, %v301
  %v438 = vmul.f32 %v430, %v302
  %v439 = vmul.f32 %v431, 1.442695
  %v440 = vpow.pop %v439
  %v441 = vmul.f32 %v432, 1.442695
  %v442 = vpow.pop %v441
  %v443 = vmul.f32 %v433, 1.442695
  %v444 = vpow.pop %v443
  %v445 = vmul.f32 %v434, 1.442695
  %v446 = vpow.pop %v445
  %v447 = vmul.f32 %v435, 1.442695
  %v448 = vpow.pop %v447
  %v449 = vmul.f32 %v436, 1.442695
  %v450 = vpow.pop %v449
  %v451 = vmul.f32 %v437, 1.442695
  %v452 = vpow.pop %v451
  %v453 = vmul.f32 %v438, 1.442695
  %v454 = vpow.pop %v453
  %v455 = vmul.f32 %v415, %v440
  %v456 = vmul.f32 %v416, %v442
  %v457 = vmul.f32 %v417, %v444
  %v458 = vmul.f32 %v418, %v446
  %v459 = vmul.f32 %v419, %v448
  %v460 = vmul.f32 %v420, %v450
  %v461 = vmul.f32 %v421, %v452
  %v462 = vmul.f32 %v422, %v454
  %v463 = vsub.f32 1.0, %v455
  %v464 = vsub.f32 1.0, %v456
  %v465 = vsub.f32 1.0, %v457
  %v466 = vsub.f32 1.0, %v458
  %v467 = vsub.f32 1.0, %v459
  %v468 = vsub.f32 1.0, %v460
  %v469 = vsub.f32 1.0, %v461
  %v470 = vsub.f32 1.0, %v462
  %vm471 = vcmp.ge.f32.partialorder %v287, 0.0
  %vm472 = vcmp.ge.f32.partialorder %v288, 0.0
  %vm473 = vcmp.ge.f32.partialorder %v289, 0.0
  %vm474 = vcmp.ge.f32.partialorder %v290, 0.0
  %vm475 = vcmp.ge.f32.partialorder %v291, 0.0
  %vm476 = vcmp.ge.f32.partialorder %v292, 0.0
  %vm477 = vcmp.ge.f32.partialorder %v293, 0.0
  %vm478 = vcmp.ge.f32.partialorder %v294, 0.0
  %v479 = vsub.f32 0.0, %v463
  %v480 = vsub.f32 0.0, %v464
  %v481 = vsub.f32 0.0, %v465
  %v482 = vsub.f32 0.0, %v466
  %v483 = vsub.f32 0.0, %v467
  %v484 = vsub.f32 0.0, %v468
  %v485 = vsub.f32 0.0, %v469
  %v486 = vsub.f32 0.0, %v470
  %v487 = vsel %vm471, %v463, %v479
  %v488 = vsel %vm472, %v464, %v480
  %v489 = vsel %vm473, %v465, %v481
  %v490 = vsel %vm474, %v466, %v482
  %v491 = vsel %vm475, %v467, %v483
  %v492 = vsel %vm476, %v468, %v484
  %v493 = vsel %vm477, %v469, %v485
  %v494 = vsel %vm478, %v470, %v486
  %v495 = vadd.f32 %v487, 1.0
  %v496 = vadd.f32 %v488, 1.0
  %v497 = vadd.f32 %v489, 1.0
  %v498 = vadd.f32 %v490, 1.0
  %v499 = vadd.f32 %v491, 1.0
  %v500 = vadd.f32 %v492, 1.0
  %v501 = vadd.f32 %v493, 1.0
  %v502 = vadd.f32 %v494, 1.0
  %v503 = vmul.f32 %v279, %v495
  %v504 = vmul.f32 %v280, %v496
  %v505 = vmul.f32 %v281, %v497
  %v506 = vmul.f32 %v282, %v498
  %v507 = vmul.f32 %v283, %v499
  %v508 = vmul.f32 %v284, %v500
  %v509 = vmul.f32 %v285, %v501
  %v510 = vmul.f32 %v286, %v502
  %v511 = vld [vmem:[%s3] sm:$0xff]
  %v512 = vld [vmem:[%s3 + $0x8] sm:$0xff]
  %v513 = vld [vmem:[%s3 + $0x10] sm:$0xff]
  %v514 = vld [vmem:[%s3 + $0x18] sm:$0xff]
  %v515 = vld [vmem:[%s4] sm:$0xff]
  %v516 = vld [vmem:[%s4 + $0x8] sm:$0xff]
  %v517 = vld [vmem:[%s4 + $0x10] sm:$0xff]
  %v518 = vld [vmem:[%s4 + $0x18] sm:$0xff]
  %520 = vset.pattern.permute.xlu0 0
  %521 = vperm.xlu0 %520, %v515
  %v522 = vpop.permute.xlu0 %521
  %525 = vset.pattern.permute.xlu0 0
  %526 = vperm.xlu0 %525, %v516
  %v527 = vpop.permute.xlu0 %526
  %530 = vset.pattern.permute.xlu0 0
  %531 = vperm.xlu0 %530, %v517
  %v532 = vpop.permute.xlu0 %531
  %535 = vset.pattern.permute.xlu0 0
  %536 = vperm.xlu0 %535, %v518
  %v537 = vpop.permute.xlu0 %536
  %vm539 = vcmask 523264
  %v541 = vsel %vm539, %v511, 0
  %v544 = vsel %vm539, %v512, 0
  %v547 = vsel %vm539, %v513, 0
  %v550 = vsel %vm539, %v514, 0
  %552 = vmatprep.subr.mxu0 0.0
  %553 = vmatpush1.msra.mxu0 %v503
  %554 = vmatprep.subr.mxu0 0.0
  %555 = vmatpush1.msra.mxu0 %v504
  %556 = vmatprep.subr.mxu0 0.0
  %557 = vmatpush1.msra.mxu0 %v505
  %558 = vmatprep.subr.mxu0 0.0
  %559 = vmatpush1.msra.mxu0 %v506
  %560 = vmatprep.subr.mxu0 0.0
  %561 = vmatpush1.msra.mxu0 %v507
  %562 = vmatprep.subr.mxu0 0.0
  %563 = vmatpush1.msra.mxu0 %v508
  %564 = vmatprep.subr.mxu0 0.0
  %565 = vmatpush1.msra.mxu0 %v509
  %566 = vmatprep.subr.mxu0 0.0
  %567 = vmatpush1.msra.mxu0 %v510
  %568 = vmatprep.subr.mxu0 0.0
  %569 = vmatpush1.msra.mxu0 0.0
  %570 = vmatprep.subr.mxu0 0.0
  %571 = vmatpush1.msra.mxu0 0.0
  %572 = vmatprep.subr.mxu0 0.0
  %573 = vmatpush1.msra.mxu0 0.0
  %574 = vmatprep.subr.mxu0 0.0
  %575 = vmatpush1.msra.mxu0 0.0
  %576 = vmatprep.subr.mxu0 0.0
  %577 = vmatpush1.msra.mxu0 0.0
  %578 = vmatprep.subr.mxu0 0.0
  %579 = vmatpush1.msra.mxu0 0.0
  %580 = vmatprep.subr.mxu0 0.0
  %581 = vmatpush1.msra.mxu0 0.0
  %582 = vmatprep.subr.mxu0 0.0
  %583 = vmatpush1.msra.mxu0 0.0
  %584 = vmatprep.subr.mxu0 0.0
  %585 = vmatpush1.msra.mxu0 0.0
  %586 = vmatprep.subr.mxu0 0.0
  %587 = vmatpush1.msra.mxu0 0.0
  %588 = vmatprep.subr.mxu0 0.0
  %589 = vmatpush1.msra.mxu0 0.0
  %590 = vmatprep.subr.mxu0 0.0
  %591 = vmatpush1.msra.mxu0 0.0
  %592 = vmatprep.subr.mxu0 0.0
  %593 = vmatpush1.msra.mxu0 0.0
  %594 = vmatprep.subr.mxu0 0.0
  %595 = vmatpush1.msra.mxu0 0.0
  %596 = vmatprep.subr.mxu0 0.0
  %597 = vmatpush1.msra.mxu0 0.0
  %598 = vmatprep.subr.mxu0 0.0
  %599 = vmatpush1.msra.mxu0 0.0
  %600 = vmatprep.subr.mxu0 0.0
  %601 = vmatpush1.msra.mxu0 0.0
  %602 = vmatprep.subr.mxu0 0.0
  %603 = vmatpush1.msra.mxu0 0.0
  %604 = vmatprep.subr.mxu0 0.0
  %605 = vmatpush1.msra.mxu0 0.0
  %606 = vmatprep.subr.mxu0 0.0
  %607 = vmatpush1.msra.mxu0 0.0
  %608 = vmatprep.subr.mxu0 0.0
  %609 = vmatpush1.msra.mxu0 0.0
  %610 = vmatprep.subr.mxu0 0.0
  %611 = vmatpush1.msra.mxu0 0.0
  %612 = vmatprep.subr.mxu0 0.0
  %613 = vmatpush1.msra.mxu0 0.0
  %614 = vmatprep.subr.mxu0 0.0
  %615 = vmatpush1.msra.mxu0 0.0
  %616 = vmatprep.mubr.f32.mxu0 0.0
  %617 = vmatmul.mubr.f32.gmra.mrb[0].mxu0 %v541
  %v618 = vpop.f32.mrb[0].mxu0
  %v619 = vadd.f32 %v522, %v618
  %v620 = vpop.f32.mrb[0].mxu0
  %621 = vmatprep.mubr.f32.mxu0 0.0
  %622 = vmatmul.mubr.f32.gmra.mrb[0].mxu0 %v544
  %v623 = vpop.f32.mrb[0].mxu0
  %v624 = vadd.f32 %v527, %v623
  %v625 = vpop.f32.mrb[0].mxu0
  %626 = vmatprep.mubr.f32.mxu0 0.0
  %627 = vmatmul.mubr.f32.gmra.mrb[0].mxu0 %v547
  %v628 = vpop.f32.mrb[0].mxu0
  %v629 = vadd.f32 %v532, %v628
  %v630 = vpop.f32.mrb[0].mxu0
  %631 = vmatprep.mubr.f32.mxu0 0.0
  %632 = vmatmul.mubr.f32.gmra.mrb[0].mxu0 %v550
  %v633 = vpop.f32.mrb[0].mxu0
  %v634 = vadd.f32 %v537, %v633
  %v635 = vpop.f32.mrb[0].mxu0
  %636 = vdwg.mxu0
  %v637 = vmul.f32 %v619, 0.5
  %v638 = vmul.f32 %v624, 0.5
  %v639 = vmul.f32 %v629, 0.5
  %v640 = vmul.f32 %v634, 0.5
  %v641 = vmul.f32 %v619, 0.70710677
  %v642 = vmul.f32 %v624, 0.70710677
  %v643 = vmul.f32 %v629, 0.70710677
  %v644 = vmul.f32 %v634, 0.70710677
  %v645 = vand.u32 2147483647, %v641
  %v646 = vand.u32 2147483647, %v642
  %v647 = vand.u32 2147483647, %v643
  %v648 = vand.u32 2147483647, %v644
  %v649 = vmul.f32 %v645, 0.3275911
  %v650 = vmul.f32 %v646, 0.3275911
  %v651 = vmul.f32 %v647, 0.3275911
  %v652 = vmul.f32 %v648, 0.3275911
  %v653 = vadd.f32 %v649, 1.0
  %v654 = vadd.f32 %v650, 1.0
  %v655 = vadd.f32 %v651, 1.0
  %v656 = vadd.f32 %v652, 1.0
  %v657 = vrcp.pop %v653
  %v658 = vrcp.pop %v654
  %v659 = vrcp.pop %v655
  %v660 = vrcp.pop %v656
  %v661 = vmul.f32 %v653, %v657
  %v662 = vmul.f32 %v654, %v658
  %v663 = vmul.f32 %v655, %v659
  %v664 = vmul.f32 %v656, %v660
  %v665 = vsub.f32 2.0, %v661
  %v666 = vsub.f32 2.0, %v662
  %v667 = vsub.f32 2.0, %v663
  %v668 = vsub.f32 2.0, %v664
  %v669 = vmul.f32 %v657, %v665
  %v670 = vmul.f32 %v658, %v666
  %v671 = vmul.f32 %v659, %v667
  %v672 = vmul.f32 %v660, %v668
  %v673 = vmul.f32 %v669, 1.0614054
  %v674 = vmul.f32 %v670, 1.0614054
  %v675 = vmul.f32 %v671, 1.0614054
  %v676 = vmul.f32 %v672, 1.0614054
  %v677 = vadd.f32 %v673, -1.4531521
  %v678 = vadd.f32 %v674, -1.4531521
  %v679 = vadd.f32 %v675, -1.4531521
  %v680 = vadd.f32 %v676, -1.4531521
  %v681 = vmul.f32 %v669, %v677
  %v682 = vmul.f32 %v670, %v678
  %v683 = vmul.f32 %v671, %v679
  %v684 = vmul.f32 %v672, %v680
  %v685 = vadd.f32 %v681, 1.4214138
  %v686 = vadd.f32 %v682, 1.4214138
  %v687 = vadd.f32 %v683, 1.4214138
  %v688 = vadd.f32 %v684, 1.4214138
  %v689 = vmul.f32 %v669, %v685
  %v690 = vmul.f32 %v670, %v686
  %v691 = vmul.f32 %v671, %v687
  %v692 = vmul.f32 %v672, %v688
  %v693 = vadd.f32 %v689, -0.28449672
  %v694 = vadd.f32 %v690, -0.28449672
  %v695 = vadd.f32 %v691, -0.28449672
  %v696 = vadd.f32 %v692, -0.28449672
  %v697 = vmul.f32 %v669, %v693
  %v698 = vmul.f32 %v670, %v694
  %v699 = vmul.f32 %v671, %v695
  %v700 = vmul.f32 %v672, %v696
  %v701 = vadd.f32 %v697, 0.2548296
  %v702 = vadd.f32 %v698, 0.2548296
  %v703 = vadd.f32 %v699, 0.2548296
  %v704 = vadd.f32 %v700, 0.2548296
  %v705 = vmul.f32 %v669, %v701
  %v706 = vmul.f32 %v670, %v702
  %v707 = vmul.f32 %v671, %v703
  %v708 = vmul.f32 %v672, %v704
  %v709 = vsub.f32 0.0, %v645
  %v710 = vsub.f32 0.0, %v646
  %v711 = vsub.f32 0.0, %v647
  %v712 = vsub.f32 0.0, %v648
  %v713 = vmul.f32 %v709, %v645
  %v714 = vmul.f32 %v710, %v646
  %v715 = vmul.f32 %v711, %v647
  %v716 = vmul.f32 %v712, %v648
  %v717 = vmul.f32 %v713, 1.442695
  %v718 = vpow.pop %v717
  %v719 = vmul.f32 %v714, 1.442695
  %v720 = vpow.pop %v719
  %v721 = vmul.f32 %v715, 1.442695
  %v722 = vpow.pop %v721
  %v723 = vmul.f32 %v716, 1.442695
  %v724 = vpow.pop %v723
  %v725 = vmul.f32 %v705, %v718
  %v726 = vmul.f32 %v706, %v720
  %v727 = vmul.f32 %v707, %v722
  %v728 = vmul.f32 %v708, %v724
  %v729 = vsub.f32 1.0, %v725
  %v730 = vsub.f32 1.0, %v726
  %v731 = vsub.f32 1.0, %v727
  %v732 = vsub.f32 1.0, %v728
  %vm733 = vcmp.ge.f32.partialorder %v641, 0.0
  %vm734 = vcmp.ge.f32.partialorder %v642, 0.0
  %vm735 = vcmp.ge.f32.partialorder %v643, 0.0
  %vm736 = vcmp.ge.f32.partialorder %v644, 0.0
  %v737 = vsub.f32 0.0, %v729
  %v738 = vsub.f32 0.0, %v730
  %v739 = vsub.f32 0.0, %v731
  %v740 = vsub.f32 0.0, %v732
  %v741 = vsel %vm733, %v729, %v737
  %v742 = vsel %vm734, %v730, %v738
  %v743 = vsel %vm735, %v731, %v739
  %v744 = vsel %vm736, %v732, %v740
  %v745 = vadd.f32 %v741, 1.0
  %v746 = vadd.f32 %v742, 1.0
  %v747 = vadd.f32 %v743, 1.0
  %v748 = vadd.f32 %v744, 1.0
  %v749 = vmul.f32 %v637, %v745
  %v750 = vmul.f32 %v638, %v746
  %v751 = vmul.f32 %v639, %v747
  %v752 = vmul.f32 %v640, %v748
  %v753 = vld [vmem:[%s5] sm:$0xff]
  %v754 = vld [vmem:[%s6] sm:$0xff]
  %756 = vset.pattern.permute.xlu0 0
  %757 = vperm.xlu0 %756, %v754
  %v758 = vpop.permute.xlu0 %757
  %v761 = vsel %vm101, %v753, 0
  %763 = vmatprep.subr.mxu0 0.0
  %764 = vmatpush1.msra.mxu0 %v749
  %765 = vmatprep.subr.mxu0 0.0
  %766 = vmatpush1.msra.mxu0 %v750
  %767 = vmatprep.subr.mxu0 0.0
  %768 = vmatpush1.msra.mxu0 %v751
  %769 = vmatprep.subr.mxu0 0.0
  %770 = vmatpush1.msra.mxu0 %v752
  %771 = vmatprep.subr.mxu0 0.0
  %772 = vmatpush1.msra.mxu0 0.0
  %773 = vmatprep.subr.mxu0 0.0
  %774 = vmatpush1.msra.mxu0 0.0
  %775 = vmatprep.subr.mxu0 0.0
  %776 = vmatpush1.msra.mxu0 0.0
  %777 = vmatprep.subr.mxu0 0.0
  %778 = vmatpush1.msra.mxu0 0.0
  %779 = vmatprep.subr.mxu0 0.0
  %780 = vmatpush1.msra.mxu0 0.0
  %781 = vmatprep.subr.mxu0 0.0
  %782 = vmatpush1.msra.mxu0 0.0
  %783 = vmatprep.subr.mxu0 0.0
  %784 = vmatpush1.msra.mxu0 0.0
  %785 = vmatprep.subr.mxu0 0.0
  %786 = vmatpush1.msra.mxu0 0.0
  %787 = vmatprep.subr.mxu0 0.0
  %788 = vmatpush1.msra.mxu0 0.0
  %789 = vmatprep.subr.mxu0 0.0
  %790 = vmatpush1.msra.mxu0 0.0
  %791 = vmatprep.subr.mxu0 0.0
  %792 = vmatpush1.msra.mxu0 0.0
  %793 = vmatprep.subr.mxu0 0.0
  %794 = vmatpush1.msra.mxu0 0.0
  %795 = vmatprep.subr.mxu0 0.0
  %796 = vmatpush1.msra.mxu0 0.0
  %797 = vmatprep.subr.mxu0 0.0
  %798 = vmatpush1.msra.mxu0 0.0
  %799 = vmatprep.subr.mxu0 0.0
  %800 = vmatpush1.msra.mxu0 0.0
  %801 = vmatprep.subr.mxu0 0.0
  %802 = vmatpush1.msra.mxu0 0.0
  %803 = vmatprep.subr.mxu0 0.0
  %804 = vmatpush1.msra.mxu0 0.0
  %805 = vmatprep.subr.mxu0 0.0
  %806 = vmatpush1.msra.mxu0 0.0
  %807 = vmatprep.subr.mxu0 0.0
  %808 = vmatpush1.msra.mxu0 0.0
  %809 = vmatprep.subr.mxu0 0.0
  %810 = vmatpush1.msra.mxu0 0.0
  %811 = vmatprep.subr.mxu0 0.0
  %812 = vmatpush1.msra.mxu0 0.0
  %813 = vmatprep.subr.mxu0 0.0
  %814 = vmatpush1.msra.mxu0 0.0
  %815 = vmatprep.subr.mxu0 0.0
  %816 = vmatpush1.msra.mxu0 0.0
  %817 = vmatprep.subr.mxu0 0.0
  %818 = vmatpush1.msra.mxu0 0.0
  %819 = vmatprep.subr.mxu0 0.0
  %820 = vmatpush1.msra.mxu0 0.0
  %821 = vmatprep.subr.mxu0 0.0
  %822 = vmatpush1.msra.mxu0 0.0
  %823 = vmatprep.subr.mxu0 0.0
  %824 = vmatpush1.msra.mxu0 0.0
  %825 = vmatprep.subr.mxu0 0.0
  %826 = vmatpush1.msra.mxu0 0.0
  %827 = vmatprep.mubr.f32.mxu0 0.0
  %828 = vmatmul.mubr.f32.gmra.mrb[0].mxu0 %v761
  %v829 = vpop.f32.mrb[0].mxu0
  %v830 = vadd.f32 %v758, %v829
  %v831 = vpop.f32.mrb[0].mxu0
  %832 = vdwg.mxu0
  %v833 = vrot.slane %v830, 4
  %v834 = vmax.f32 %v830, %v833
  %v835 = vrot.slane %v834, 2
  %v836 = vmax.f32 %v834, %v835
  %v837 = vrot.slane %v836, 1
  %v838 = vmax.f32 %v836, %v837
  %v839 = vsub.f32 %v830, %v838
  %v840 = vmul.f32 %v839, 1.442695
  %v841 = vpow.pop %v840
  %v842 = vrot.slane %v841, 4
  %v843 = vadd.f32 %v841, %v842
  %v844 = vrot.slane %v843, 2
  %v845 = vadd.f32 %v843, %v844
  %v846 = vrot.slane %v845, 1
  %v847 = vadd.f32 %v845, %v846
  %v848 = vrcp.pop %v847
  %v849 = vmul.f32 %v847, %v848
  %v850 = vsub.f32 2.0, %v849
  %v851 = vmul.f32 %v848, %v850
  %v852 = vmul.f32 %v841, %v851
  %v853 = vlog2.pop %v847
  %v854 = vmul.f32 %v853, 0.6931472
  %v855 = vadd.f32 %v838, %v854
  %v856 = vlaneseq
  %v857 = vshrl.u32 %v856, 7
  %v858 = vcvt.s32.f32 %v857
  %v859 = vrot.slane %v852, 4
  %v860 = vmax.f32 %v852, %v859
  %v861 = vrot.slane %v860, 2
  %v862 = vmax.f32 %v860, %v861
  %v863 = vrot.slane %v862, 1
  %v864 = vmax.f32 %v862, %v863
  %vm865 = vcmp.eq.f32.partialorder %v852, %v864
  %v866 = vsel %vm865, %v858, 8.0
  %v867 = vrot.slane %v866, 4
  %v868 = vmin.f32 %v866, %v867
  %v869 = vrot.slane %v868, 2
  %v870 = vmin.f32 %v868, %v869
  %v871 = vrot.slane %v870, 1
  %v872 = vmin.f32 %v870, %v871
  %vm873 = vcmp.eq.f32.partialorder %v858, %v872
  %v874 = vsel %vm873, -1.0, %v852
  %v875 = vrot.slane %v874, 4
  %v876 = vmax.f32 %v874, %v875
  %v877 = vrot.slane %v876, 2
  %v878 = vmax.f32 %v876, %v877
  %v879 = vrot.slane %v878, 1
  %v880 = vmax.f32 %v878, %v879
  %vm881 = vcmp.eq.f32.partialorder %v874, %v880
  %v882 = vsel %vm881, %v858, 8.0
  %v883 = vrot.slane %v882, 4
  %v884 = vmin.f32 %v882, %v883
  %v885 = vrot.slane %v884, 2
  %v886 = vmin.f32 %v884, %v885
  %v887 = vrot.slane %v886, 1
  %v888 = vmin.f32 %v886, %v887
  %v889 = vadd.f32 %v864, %v880
  %v890 = vrcp.pop %v889
  %v891 = vmul.f32 %v889, %v890
  %v892 = vsub.f32 2.0, %v891
  %v893 = vmul.f32 %v890, %v892
  %894 = vst [vmem:[%s7] sm:$0xff] %v852
  %895 = vst [vmem:[%s8] sm:$0x1] %v872
  %v896 = vmul.f32 %v864, %v893
  %897 = vst [vmem:[%s8 + $0x2] sm:$0x1] %v896
  %898 = vst [vmem:[%s8 + $0x1] sm:$0x1] %v888
  %v899 = vmul.f32 %v880, %v893
  %900 = vst [vmem:[%s8 + $0x3] sm:$0x1] %v899
  %901 = vst [vmem:[%s9] sm:$0x1] %v855
  // Predicated region
  $region30: #{_forward_impl.1} parent=0 // pred_check
    _
  $region31: #{_forward_impl.1} parent=0 // pred_check_branch
    %903 = sbr.rel (0) target = $region33
  $region32: #{_forward_impl.1} parent=0 // pred_region
    _
  $region33: #{_forward_impl.1} parent=0 // pred_fallthru
    _
  // Predicated region
  $region34: #{_forward_impl.1} parent=0 // pred_check
    _
  $region35: #{_forward_impl.1} parent=0 // pred_check_branch
    %905 = sbr.rel (0) target = $region37
  $region36: #{_forward_impl.1} parent=0 // pred_region
    _
  $region37: #{_forward_impl.1} parent=0 // pred_fallthru
    _
  // Predicated region
  $region38: #{_forward_impl.1} parent=0 // pred_check
    _
  $region39: #{_forward_impl.1} parent=0 // pred_check_branch
    %907 = sbr.rel (0) target = $region41
  $region40: #{_forward_impl.1} parent=0 // pred_region
    _
  $region41: #{_forward_impl.1} parent=0 // pred_fallthru
    _
  // Predicated region
  $region42: #{_forward_impl.1} parent=0 // pred_check
    _
  $region43: #{_forward_impl.1} parent=0 // pred_check_branch
    %909 = sbr.rel (0) target = $region45
  $region44: #{_forward_impl.1} parent=0 // pred_region
    _
  $region45: #{_forward_impl.1} parent=0 // pred_fallthru
    _
  // Predicated region
  $region46: #{_forward_impl.1} parent=0 // pred_check
    _
  $region47: #{_forward_impl.1} parent=0 // pred_check_branch
    %911 = sbr.rel (0) target = $region49
  $region48: #{_forward_impl.1} parent=0 // pred_region
    _
  $region49: #{_forward_impl.1} parent=0 // pred_fallthru
    _
  // Predicated region
  $region50: #{_forward_impl.1} parent=0 // pred_check
    _
  $region51: #{_forward_impl.1} parent=0 // pred_check_branch
    %913 = sbr.rel (0) target = $region53
  $region52: #{_forward_impl.1} parent=0 // pred_region
    _
  $region53: #{_forward_impl.1} parent=0 // pred_fallthru
    _

</llo_original>
